<compile_context>
chip_gen: v6e
topology: v6e:2x2x1
jax: 0.10.0
libtpu: 0.0.40
codegen_flags: <defaults>
</compile_context>

<pallas_src>
import jax
import jax.numpy as jnp
import numpy as np
from jax.experimental import pallas as pl
from jax.experimental.pallas import tpu as pltpu


def _round_up(x, m):
    return ((x + m - 1) // m) * m


def _temporal_attention_kernel(enc_ref, finp_ref, wencT_ref, v_ref, out_ref):
    # enc_ref:   (BB, S, H)  encoder outputs for this batch block (f32 or bf16)
    # finp_ref:  (BB, 1, H)  precomputed final_hidden @ W_fin.T + bias (f32)
    # wencT_ref: (H, H)      attn.weight[:, :H].T (same dtype as enc)
    # v_ref:     (1, H)      v.weight (f32)
    # out_ref:   (BB, H)     context vectors
    BB, S, H = enc_ref.shape

    # Energy projection: one dense (BB*S, H) x (H, H) MXU matmul, f32 accumulate.
    proj = jnp.dot(enc_ref[...].reshape(BB * S, H), wencT_ref[...],
                   preferred_element_type=jnp.float32).reshape(BB, S, H)

    # energy = tanh(enc @ W_enc.T + (fin @ W_fin.T + b)); fin term broadcasts over S.
    energy = jnp.tanh(proj + finp_ref[...].astype(jnp.float32))      # (BB, S, H) f32

    # scores = energy @ v.T  -> (BB, S, 1)   (VPU mul + cross-lane reduce)
    scores = jnp.sum(energy * v_ref[...].astype(jnp.float32),
                     axis=2, keepdims=True)                          # (BB, S, 1)

    # Exact softmax over the sequence axis (approx reciprocal removed: it cost
    # ~1e-3 relative error and broke bit-level agreement with the reference).
    m = jnp.max(scores, axis=1, keepdims=True)                       # (BB, 1, 1)
    e = jnp.exp(scores - m)                                          # (BB, S, 1)
    denom = jnp.sum(e, axis=1, keepdims=True)                        # (BB, 1, 1)
    weights = e / denom                                              # (BB, S, 1)

    # context = sum_S weights * enc  (re-read enc_ref: short live range, block is
    # already resident in VMEM, avoids spilling a (BB,S,H) f32 value across the body)
    context = jnp.sum(weights * enc_ref[...].astype(jnp.float32), axis=1)   # (BB, H)
    out_ref[...] = context.astype(out_ref.dtype)


def temporal_attention(encoder_outputs, final_hidden, attn_w, attn_b, v_w,
                       *, block_b=None, input_dtype=jnp.float32):
    """
    encoder_outputs: (B, S, H) float32
    final_hidden:    (B, H)    float32
    attn_w:          (H, 2H)   nn.Linear(2H, H).weight
    attn_b:          (H,)      nn.Linear(2H, H).bias
    v_w:             (1, H)    nn.Linear(H, 1, bias=False).weight
    input_dtype:     dtype used for the enc stream / W_enc^T inside the kernel
                     (jnp.bfloat16 halves HBM traffic; accumulation stays f32)
    returns context: (B, H)
    """
    B, S, H = encoder_outputs.shape
    out_dtype = encoder_outputs.dtype

    # Parameter glue (plain JAX): split attn weight so the concat is avoided,
    # pre-transpose for row-major matmuls.
    wencT = attn_w[:, :H].T.astype(input_dtype)                      # (H, H)
    wfinT = attn_w[:, H:].T.astype(jnp.float32)                      # (H, H)
    v = v_w.reshape(1, H).astype(jnp.float32)                        # (1, H)

    # Hoisted out of the kernel: one batched (B,H)x(H,H) XLA matmul + bias (f32).
    fin_proj = (final_hidden.astype(jnp.float32) @ wfinT
                + attn_b.astype(jnp.float32)).reshape(B, 1, H)

    enc = encoder_outputs.astype(input_dtype)
    in_bytes = jnp.dtype(input_dtype).itemsize

    # --- Generation-aware VMEM budget with lane/sublane padded accounting ---
    try:
        vmem_cap = int(pltpu.get_tpu_info().vmem_capacity_bytes)
    except Exception:
        vmem_cap = 64 * 1024 * 1024   # conservative fallback (v7x-sized)
    vmem_limit = int(vmem_cap * 0.75)          # explicit scoped limit for Mosaic
    budget = int(vmem_limit * 0.6)             # headroom for spills / compiler scratch

    Hl = _round_up(H, 128)                     # lane padding
    Sp = _round_up(S, 8)                       # sublane padding

    def _fits(bb):
        bbp = _round_up(bb, 8)
        enc_b = 2 * bb * Sp * Hl * in_bytes            # double-buffered enc blocks
        fin_b = 2 * bb * 8 * Hl * 4                    # fin projection blocks (f32)
        w_b = 2 * _round_up(H, 8) * Hl * in_bytes      # W_enc^T (invariant, 2x conservative)
        v_b = 2 * 8 * Hl * 4
        out_b = 2 * bbp * Hl * 4
        interm = 2 * bb * Sp * Hl * 4                  # f32 proj/energy + spill slack
        return enc_b + fin_b + w_b + v_b + out_b + interm <= budget

    # --- Batch block selection: multiple of 8 (or exactly B), >= ~1024 rows ---
    if block_b is not None:
        BB = int(max(1, min(block_b, B)))
        if BB != B and BB % 8 != 0:
            BB = max(8, (BB // 8) * 8) if B > 8 else B
    elif B <= 8:
        BB = B                                          # block dim == full array dim is legal
    else:
        BB = _round_up(max(8, pl.cdiv(1024, S)), 8)     # target >= ~1024 flattened MXU rows
        # Allow >= 2 grid steps (v7x: 2 TCs) only if each step still gets >= 512 rows.
        max_bb_2steps = ((B // 2) // 8) * 8
        if max_bb_2steps >= 8 and max_bb_2steps * S >= 512:
            BB = min(BB, max_bb_2steps)
        BB = min(BB, max(8, (B // 8) * 8))              # don't over-pad the batch
        while BB > 8 and not _fits(BB):
            BB -= 8
        BB = max(BB, 8)

    # Pad B to a multiple of BB (zero rows are harmless: softmax of zeros is finite).
    Bp = _round_up(B, BB)
    if Bp != B:
        pad = Bp - B
        enc = jnp.pad(enc, ((0, pad), (0, 0), (0, 0)))
        fin_proj = jnp.pad(fin_proj, ((0, pad), (0, 0), (0, 0)))
    grid = (Bp // BB,)

    out = pl.pallas_call(
        _temporal_attention_kernel,
        out_shape=jax.ShapeDtypeStruct((Bp, H), out_dtype),
        grid_spec=pltpu.PrefetchScalarGridSpec(
            num_scalar_prefetch=0,
            grid=grid,
            in_specs=[
                pl.BlockSpec((BB, S, H), lambda b: (b, 0, 0)),   # encoder_outputs
                pl.BlockSpec((BB, 1, H), lambda b: (b, 0, 0)),   # fin projection
                pl.BlockSpec((H, H), lambda b: (0, 0)),          # W_enc^T (grid-invariant)
                pl.BlockSpec((1, H), lambda b: (0, 0)),          # v       (grid-invariant)
            ],
            out_specs=pl.BlockSpec((BB, H), lambda b: (b, 0)),   # dense (BB, H) slab
        ),
        compiler_params=pltpu.CompilerParams(
            dimension_semantics=("parallel",),
            vmem_limit_bytes=vmem_limit),
    )(enc, fin_proj, wencT, v)

    return out[:B]


def _reference(encoder_outputs, final_hidden, attn_w, attn_b, v_w):
    """Pure-JAX reference mirroring the PyTorch forward exactly."""
    B, S, H = encoder_outputs.shape
    fin_exp = jnp.repeat(final_hidden[:, None, :], S, axis=1)       # (B,S,H)
    cat = jnp.concatenate([encoder_outputs, fin_exp], axis=2)       # (B,S,2H)
    energy = jnp.tanh(jnp.einsum('bsk,hk->bsh', cat, attn_w) + attn_b)
    scores = jnp.einsum('bsh,oh->bso', energy, v_w)[..., 0]         # (B,S)
    weights = jax.nn.softmax(scores, axis=1)
    context = jnp.einsum('bs,bsh->bh', weights, encoder_outputs)
    return context


if __name__ == "__main__":
    # Small shapes matching the module (batch=2, seq=8, hidden=32).
    B, S, H = 2, 8, 32
    key = jax.random.PRNGKey(0)
    k_enc, k_fin, k_w, k_b, k_v = jax.random.split(key, 5)

    encoder_outputs = jax.random.normal(k_enc, (B, S, H), dtype=jnp.float32)
    final_hidden = jax.random.normal(k_fin, (B, H), dtype=jnp.float32)
    attn_w = jax.random.normal(k_w, (H, 2 * H), dtype=jnp.float32) * 0.1
    attn_b = jax.random.normal(k_b, (H,), dtype=jnp.float32) * 0.1
    v_w = jax.random.normal(k_v, (1, H), dtype=jnp.float32) * 0.1

    ref = _reference(encoder_outputs, final_hidden, attn_w, attn_b, v_w)

    # 1) Exact f32 path (matches the PyTorch module's f32 semantics).
    ctx = jax.block_until_ready(
        temporal_attention(encoder_outputs, final_hidden, attn_w, attn_b, v_w))
    np.testing.assert_allclose(np.asarray(ctx), np.asarray(ref), rtol=2e-5, atol=2e-5)

    # 2) bf16-input fast path (halved HBM traffic, native bf16 MXU), looser tolerance.
    ctx_bf16 = jax.block_until_ready(
        temporal_attention(encoder_outputs, final_hidden, attn_w, attn_b, v_w,
                           input_dtype=jnp.bfloat16))
    np.testing.assert_allclose(np.asarray(ctx_bf16), np.asarray(ref), rtol=3e-2, atol=3e-2)

    # 3) Larger batch exercising the multi-step grid + batch-padding path.
    B2, S2, H2 = 24, 16, 128
    k2 = jax.random.split(jax.random.PRNGKey(1), 5)
    enc2 = jax.random.normal(k2[0], (B2, S2, H2), dtype=jnp.float32)
    fin2 = jax.random.normal(k2[1], (B2, H2), dtype=jnp.float32)
    w2 = jax.random.normal(k2[2], (H2, 2 * H2), dtype=jnp.float32) * 0.05
    b2 = jax.random.normal(k2[3], (H2,), dtype=jnp.float32) * 0.05
    v2 = jax.random.normal(k2[4], (1, H2), dtype=jnp.float32) * 0.05
    ref2 = _reference(enc2, fin2, w2, b2, v2)
    ctx2 = jax.block_until_ready(temporal_attention(enc2, fin2, w2, b2, v2))
    np.testing.assert_allclose(np.asarray(ctx2), np.asarray(ref2), rtol=2e-5, atol=2e-5)

    print("KERNEL_OK")
</pallas_src>

<mosaic_0001>
module attributes {stable_mosaic.version = 11 : i64} {
  func.func @_temporal_attention_kernel(%arg0: i32, %arg1: memref<2x8x32xf32, #tpu.memory_space<vmem>>, %arg2: memref<2x1x32xf32, #tpu.memory_space<vmem>>, %arg3: memref<32x32xf32, #tpu.memory_space<vmem>>, %arg4: memref<1x32xf32, #tpu.memory_space<vmem>>, %arg5: memref<2x32xf32, #tpu.memory_space<vmem>>) attributes {dimension_semantics = [#tpu.dimension_semantics<parallel>], iteration_bounds = array<i64: 1>, scalar_prefetch = 0 : i64, scratch_operands = 0 : i64, tpu.core_type = #tpu.core_type<tc>, window_params = [{transform_indices = @transform_0, window_bounds = array<i64: 2, 8, 32>}, {transform_indices = @transform_1, window_bounds = array<i64: 2, 1, 32>}, {pipeline_mode = #tpu.pipeline_mode<synchronous>, transform_indices = @transform_2, window_bounds = array<i64: 32, 32>}, {pipeline_mode = #tpu.pipeline_mode<synchronous>, transform_indices = @transform_3, window_bounds = array<i64: 1, 32>}, {transform_indices = @transform_4, window_bounds = array<i64: 2, 32>}]} {
    %c0 = arith.constant 0 : index
    %c0_0 = arith.constant 0 : index
    %c0_1 = arith.constant 0 : index
    %0 = vector.load %arg1[%c0, %c0_0, %c0_1] : memref<2x8x32xf32, #tpu.memory_space<vmem>>, vector<2x8x32xf32>
    %1 = vector.shape_cast %0 : vector<2x8x32xf32> to vector<16x32xf32>
    %c0_2 = arith.constant 0 : index
    %c0_3 = arith.constant 0 : index
    %2 = vector.load %arg3[%c0_2, %c0_3] : memref<32x32xf32, #tpu.memory_space<vmem>>, vector<32x32xf32>
    %cst = arith.constant dense<0.000000e+00> : vector<16x32xf32>
    %3 = tpu.matmul %1, %2, %cst {dimension_numbers = #tpu.dot_dimension_numbers<[1], [0], [0], [1], [0, 0, 1, 1], [], []>} : vector<16x32xf32>, vector<32x32xf32>, vector<16x32xf32> -> vector<16x32xf32>
    %4 = vector.shape_cast %3 : vector<16x32xf32> to vector<2x8x32xf32>
    %c0_4 = arith.constant 0 : index
    %c0_5 = arith.constant 0 : index
    %c0_6 = arith.constant 0 : index
    %5 = vector.load %arg2[%c0_4, %c0_5, %c0_6] : memref<2x1x32xf32, #tpu.memory_space<vmem>>, vector<2x1x32xf32>
    %6 = vector.broadcast %5 : vector<2x1x32xf32> to vector<2x8x32xf32>
    %7 = arith.addf %4, %6 : vector<2x8x32xf32>
    %8 = math.tanh %7 : vector<2x8x32xf32>
    %c0_7 = arith.constant 0 : index
    %c0_8 = arith.constant 0 : index
    %9 = vector.load %arg4[%c0_7, %c0_8] : memref<1x32xf32, #tpu.memory_space<vmem>>, vector<1x32xf32>
    %10 = vector.shape_cast %9 : vector<1x32xf32> to vector<1x1x32xf32>
    %11 = vector.broadcast %10 : vector<1x1x32xf32> to vector<2x8x32xf32>
    %12 = arith.mulf %8, %11 : vector<2x8x32xf32>
    %cst_9 = arith.constant dense<0.000000e+00> : vector<2x8xf32>
    %13 = vector.multi_reduction <add>, %12, %cst_9 [2] : vector<2x8x32xf32> to vector<2x8xf32>
    %14 = vector.shape_cast %13 : vector<2x8xf32> to vector<2x8x1xf32>
    %cst_10 = arith.constant dense<0xFF800000> : vector<2x1xf32>
    %15 = vector.multi_reduction <maximumf>, %14, %cst_10 [1] : vector<2x8x1xf32> to vector<2x1xf32>
    %16 = vector.shape_cast %15 : vector<2x1xf32> to vector<2x1x1xf32>
    %17 = vector.broadcast %16 : vector<2x1x1xf32> to vector<2x8x1xf32>
    %18 = arith.subf %14, %17 : vector<2x8x1xf32>
    %19 = math.exp %18 : vector<2x8x1xf32>
    %cst_11 = arith.constant dense<0.000000e+00> : vector<2x1xf32>
    %20 = vector.multi_reduction <add>, %19, %cst_11 [1] : vector<2x8x1xf32> to vector<2x1xf32>
    %21 = vector.shape_cast %20 : vector<2x1xf32> to vector<2x1x1xf32>
    %22 = vector.broadcast %21 : vector<2x1x1xf32> to vector<2x8x1xf32>
    %23 = arith.divf %19, %22 : vector<2x8x1xf32>
    %c0_12 = arith.constant 0 : index
    %c0_13 = arith.constant 0 : index
    %c0_14 = arith.constant 0 : index
    %24 = vector.load %arg1[%c0_12, %c0_13, %c0_14] : memref<2x8x32xf32, #tpu.memory_space<vmem>>, vector<2x8x32xf32>
    %25 = vector.broadcast %23 : vector<2x8x1xf32> to vector<2x8x32xf32>
    %26 = arith.mulf %25, %24 : vector<2x8x32xf32>
    %cst_15 = arith.constant dense<0.000000e+00> : vector<2x32xf32>
    %27 = vector.multi_reduction <add>, %26, %cst_15 [1] : vector<2x8x32xf32> to vector<2x32xf32>
    %c0_16 = arith.constant 0 : index
    %c0_17 = arith.constant 0 : index
    %28 = vector.load %arg5[%c0_16, %c0_17] : memref<2x32xf32, #tpu.memory_space<vmem>>, vector<2x32xf32>
    tpu.vector_store %arg5[%c0_16, %c0_17], %27 {strides = array<i32>} : memref<2x32xf32, #tpu.memory_space<vmem>>, vector<2x32xf32>,
    return
  }
  func.func @transform_0(%arg0: i32) -> (i32, i32, i32) {
    %c0_i32 = arith.constant 0 : i32
    %c0_i32_0 = arith.constant 0 : i32
    %c0_i32_1 = arith.constant 0 : i32
    return %arg0, %c0_i32, %c0_i32_0 : i32, i32, i32
  }
  func.func @transform_1(%arg0: i32) -> (i32, i32, i32) {
    %c0_i32 = arith.constant 0 : i32
    %c0_i32_0 = arith.constant 0 : i32
    %c0_i32_1 = arith.constant 0 : i32
    return %arg0, %c0_i32, %c0_i32_0 : i32, i32, i32
  }
  func.func @transform_2(%arg0: i32) -> (i32, i32) {
    %c0_i32 = arith.constant 0 : i32
    %c0_i32_0 = arith.constant 0 : i32
    %c0_i32_1 = arith.constant 0 : i32
    return %c0_i32, %c0_i32_0 : i32, i32
  }
  func.func @transform_3(%arg0: i32) -> (i32, i32) {
    %c0_i32 = arith.constant 0 : i32
    %c0_i32_0 = arith.constant 0 : i32
    %c0_i32_1 = arith.constant 0 : i32
    return %c0_i32, %c0_i32_0 : i32, i32
  }
  func.func @transform_4(%arg0: i32) -> (i32, i32) {
    %c0_i32 = arith.constant 0 : i32
    %c0_i32_0 = arith.constant 0 : i32
    return %arg0, %c0_i32 : i32, i32
  }
}

</mosaic_0001>

<llo_original>
// kernel: tpu_custom_call.1
$region0: #{tpu_custom_call.1}
  #allocation0 [shape = 'u32[]', space=smem, size = 0x4, offset = 0x4, fixed_abs, tag = 'smem constant byte address 0x4 - core index']
  #allocation1 [shape = 'u32[144,128]{1,0:T(1,128)}', space=vmem, size = 0x12000, scoped, tag = 'internal scratch']
  %s0 = inlined_call_operand.hbm [shape: f32[2,8,32], index: 0, kind: input, shape index: {}]
  %s1 = inlined_call_operand.hbm [shape: f32[2,1,32], index: 1, kind: input, shape index: {}]
  %s2 = inlined_call_operand.hbm [shape: f32[32,32], index: 2, kind: input, shape index: {}]
  %s3 = inlined_call_operand.vmem [shape: f32[1,32], index: 3, kind: input, shape index: {}]
  %s4 = inlined_call_operand.hbm [shape: f32[2,32], index: 4, kind: output, shape index: {}]
  %s5 = sld [smem:[#allocation0]]
  $region38: #{tpu_custom_call.1} parent=0
    _
  %s7 = ssub.s32 1, %s5
  %s8 = scalar_select 0, %s7, %s5
  $region1: #{tpu_custom_call.1} parent=0
    #allocation2 [shape = 'u8[8192]{0}', space=vmem, size = 0x2000, scoped, tag = 'input window, operand 0, single buffered']
    #allocation3 [shape = 's32[1]{0}', space=sflag, size = 0x4, scoped, tag = 'scoped memory for tpu_custom_call.1']
    #allocation4 [shape = 's32[1]{0}', space=sflag, size = 0x4, scoped, tag = 'scoped memory for tpu_custom_call.1']
    #allocation5 [shape = 'u8[1024]{0}', space=vmem, size = 0x400, scoped, tag = 'input window, operand 1, single buffered']
    #allocation6 [shape = 's32[1]{0}', space=sflag, size = 0x4, scoped, tag = 'scoped memory for tpu_custom_call.1']
    #allocation7 [shape = 'u8[16384]{0}', space=vmem, size = 0x4000, scoped, tag = 'input window, operand 2, single buffered']
    #allocation8 [shape = 'u8[1024]{0}', space=vmem, size = 0x400, scoped, tag = 'output window, operand 0, single buffered']
    %9 = vsyncpa [#allocation3], 0
    %10 = vsyncpa [#allocation6], 0
    %11 = vsyncpa [#allocation4], 0
    // Predicated region
    $region2: #{tpu_custom_call.1} parent=1 // pred_check
      _
    $region3: #{tpu_custom_call.1} parent=1 // pred_check_branch
      %13 = sbr.rel (0) target = $region5
    $region4: #{tpu_custom_call.1} parent=1 // pred_region
      %s15 = ssub.s32 256, 256
      %16 = vsyncadd [#allocation3], %s15
      %s17 = sshll.u32 [#allocation2], 4
      %s18 = int_to_ptr.vmem [resolvable:$true] %s17
      %23 = dma.hbm_to_vmem [thread:$0]  %s0, 256, %s18, [#allocation3], 128, 128, 8
    $region5: #{tpu_custom_call.1} parent=1 // pred_fallthru
      _
    // Predicated region
    $region6: #{tpu_custom_call.1} parent=1 // pred_check
      _
    $region7: #{tpu_custom_call.1} parent=1 // pred_check_branch
      %25 = sbr.rel (0) target = $region9
    $region8: #{tpu_custom_call.1} parent=1 // pred_region
      %s27 = ssub.s32 32, 32
      %28 = vsyncadd [#allocation6], %s27
      %s29 = sshll.u32 [#allocation5], 4
      %s30 = int_to_ptr.vmem [resolvable:$true] %s29
      %35 = dma.hbm_to_vmem [thread:$0]  %s1, 32, %s30, [#allocation6], 16, 16, 1
    $region9: #{tpu_custom_call.1} parent=1 // pred_fallthru
      _
    // Predicated region
    $region10: #{tpu_custom_call.1} parent=1 // pred_check
      _
    $region11: #{tpu_custom_call.1} parent=1 // pred_check_branch
      %37 = sbr.rel (0) target = $region13
    $region12: #{tpu_custom_call.1} parent=1 // pred_region
      %s39 = ssub.s32 512, 512
      %40 = vsyncadd [#allocation6], %s39
      %s41 = sshll.u32 [#allocation7], 4
      %s42 = int_to_ptr.vmem [resolvable:$true] %s41
      %47 = dma.hbm_to_vmem [thread:$0]  %s2, 512, %s42, [#allocation6], 128, 128, 8
    $region13: #{tpu_custom_call.1} parent=1 // pred_fallthru
      _
    // Predicated region
    $region14: #{tpu_custom_call.1} parent=1 // pred_check
      _
    $region15: #{tpu_custom_call.1} parent=1 // pred_check_branch
      %49 = sbr.rel (0) target = $region17
    $region16: #{tpu_custom_call.1} parent=1 // pred_region
      _
    $region17: #{tpu_custom_call.1} parent=1 // pred_fallthru
      _
    // Predicated region
    $region18: #{tpu_custom_call.1} parent=1 // pred_check
      _
    $region19: #{tpu_custom_call.1} parent=1 // pred_check_branch
      %51 = sbr.rel (0) target = $region21
    $region20: #{tpu_custom_call.1} parent=1 // pred_region
      %52 = dma.done [#allocation3], 256
    $region21: #{tpu_custom_call.1} parent=1 // pred_fallthru
      _
    // Predicated region
    $region22: #{tpu_custom_call.1} parent=1 // pred_check
      _
    $region23: #{tpu_custom_call.1} parent=1 // pred_check_branch
      %54 = sbr.rel (0) target = $region25
    $region24: #{tpu_custom_call.1} parent=1 // pred_region
      %55 = dma.done [#allocation6], 32
    $region25: #{tpu_custom_call.1} parent=1 // pred_fallthru
      _
    // Predicated region
    $region26: #{tpu_custom_call.1} parent=1 // pred_check
      _
    $region27: #{tpu_custom_call.1} parent=1 // pred_check_branch
      %57 = sbr.rel (0) target = $region29
    $region28: #{tpu_custom_call.1} parent=1 // pred_region
      %58 = dma.done [#allocation6], 512
    $region29: #{tpu_custom_call.1} parent=1 // pred_fallthru
      _
    %v59 = vld [vmem:[#allocation2] sm:$0xff]
    %v60 = vld [vmem:[#allocation2 + $0x8] sm:$0xff]
    %v61 = vld [vmem:[#allocation7] sm:$0xff]
    %v62 = vld [vmem:[#allocation7 + $0x8] sm:$0xff]
    %v63 = vld [vmem:[#allocation7 + $0x10] sm:$0xff]
    %v64 = vld [vmem:[#allocation7 + $0x18] sm:$0xff]
    %vm65 = vcmask 261120
    %v67 = vsel %vm65, %v59, 0
    %v70 = vsel %vm65, %v60, 0
    %72 = vmatprep.subr.mxu0 0.0
    %73 = vmatpush1.msra.mxu0 0.0
    %74 = vmatprep.subr.mxu0 0.0
    %75 = vmatpush1.msra.mxu0 0.0
    %76 = vmatprep.subr.mxu0 0.0
    %77 = vmatpush1.msra.mxu0 0.0
    %78 = vmatprep.subr.mxu0 0.0
    %79 = vmatpush1.msra.mxu0 0.0
    %80 = vmatprep.subr.mxu0 0.0
    %81 = vmatpush1.msra.mxu0 0.0
    %82 = vmatprep.subr.mxu0 0.0
    %83 = vmatpush1.msra.mxu0 0.0
    %84 = vmatprep.subr.mxu0 0.0
    %85 = vmatpush1.msra.mxu0 0.0
    %86 = vmatprep.subr.mxu0 0.0
    %87 = vmatpush1.msra.mxu0 0.0
    %88 = vmatprep.subr.mxu0 0.0
    %89 = vmatpush1.msra.mxu0 0.0
    %90 = vmatprep.subr.mxu0 0.0
    %91 = vmatpush1.msra.mxu0 0.0
    %92 = vmatprep.subr.mxu0 0.0
    %93 = vmatpush1.msra.mxu0 0.0
    %94 = vmatprep.subr.mxu0 0.0
    %95 = vmatpush1.msra.mxu0 0.0
    %96 = vmatprep.subr.mxu0 0.0
    %97 = vmatpush1.msra.mxu0 %v64
    %98 = vmatprep.subr.mxu0 0.0
    %99 = vmatpush1.msra.mxu0 %v63
    %100 = vmatprep.subr.mxu0 0.0
    %101 = vmatpush1.msra.mxu0 %v62
    %102 = vmatprep.subr.mxu0 0.0
    %103 = vmatpush1.msra.mxu0 %v61
    %104 = vmatprep.subr.mxu0 0.0
    %105 = vmatpush2.msra.mxu0 0.0
    %106 = vmatprep.subr.mxu0 0.0
    %107 = vmatpush2.msra.mxu0 0.0
    %108 = vmatprep.subr.mxu0 0.0
    %109 = vmatpush2.msra.mxu0 0.0
    %110 = vmatprep.subr.mxu0 0.0
    %111 = vmatpush2.msra.mxu0 0.0
    %112 = vmatprep.subr.mxu0 0.0
    %113 = vmatpush2.msra.mxu0 0.0
    %114 = vmatprep.subr.mxu0 0.0
    %115 = vmatpush2.msra.mxu0 0.0
    %116 = vmatprep.subr.mxu0 0.0
    %117 = vmatpush2.msra.mxu0 0.0
    %118 = vmatprep.subr.mxu0 0.0
    %119 = vmatpush2.msra.mxu0 0.0
    %120 = vmatprep.subr.mxu0 0.0
    %121 = vmatpush2.msra.mxu0 0.0
    %122 = vmatprep.subr.mxu0 0.0
    %123 = vmatpush2.msra.mxu0 0.0
    %124 = vmatprep.subr.mxu0 0.0
    %125 = vmatpush2.msra.mxu0 0.0
    %126 = vmatprep.subr.mxu0 0.0
    %127 = vmatpush2.msra.mxu0 0.0
    %128 = vmatprep.subr.mxu0 0.0
    %129 = vmatpush2.msra.mxu0 0.0
    %130 = vmatprep.subr.mxu0 0.0
    %131 = vmatpush2.msra.mxu0 0.0
    %132 = vmatprep.subr.mxu0 0.0
    %133 = vmatpush2.msra.mxu0 0.0
    %134 = vmatprep.subr.mxu0 0.0
    %135 = vmatpush2.msra.mxu0 0.0
    %136 = vmatprep.mubr.f32.mxu0 0.0
    %137 = vmatmul.mubr.f32.gmra.mxu0 %v67
    %v138 = vpop.f32.mrf.mxu0
    %v139 = vadd.f32 0.0, %v138
    %v140 = vpop.f32.mrf.mxu0
    %141 = vmatprep.mubr.f32.mxu0 0.0
    %142 = vmatmul.mubr.f32.gmra.mxu0 %v70
    %v143 = vpop.f32.mrf.mxu0
    %v144 = vadd.f32 0.0, %v143
    %v145 = vpop.f32.mrf.mxu0
    %146 = vdwg.mxu0
    %v147 = vld [vmem:[#allocation5] sm:$0x1]
    %v148 = vld [vmem:[#allocation5 + $0x1] sm:$0x1]
    %v151 = vlaneseq
    %v152 = vshrl.u32 %v151, 7
    %v153 = vsub.s32 0, %v152
    %v154 = vrot.slane %v147, %v153
    %v155 = vlaneseq
    %v156 = vshrl.u32 %v155, 7
    %v157 = vsub.s32 0, %v156
    %v158 = vrot.slane %v148, %v157
    %v161 = vadd.f32 %v139, %v154
    %v162 = vadd.f32 %v144, %v158
    %v163 = vtanh.pop %v161
    %v164 = vtanh.pop %v162
    %v165 = vld [vmem:[%s3] sm:$0x1]
    %v167 = vlaneseq
    %v168 = vshrl.u32 %v167, 7
    %v169 = vsub.s32 0, %v168
    %v170 = vrot.slane %v165, %v169
    %v172 = vmul.f32 %v163, %v170
    %v173 = vmul.f32 %v164, %v170
    %v174 = vsel %vm65, %v172, 0.0
    %175 = vadd.xlane.f32.xlu0 %v174
    %v176 = vpop.xlane.xlu0 %175
    %v177 = vsel %vm65, %v173, 0.0
    %178 = vadd.xlane.f32.xlu0 %v177
    %v179 = vpop.xlane.xlu0 %178
    %v180 = vrot.slane %v176, 4
    %v181 = vmax.f32 %v176, %v180
    %v182 = vrot.slane %v181, 2
    %v183 = vmax.f32 %v181, %v182
    %v184 = vrot.slane %v183, 1
    %v185 = vmax.f32 %v183, %v184
    %v186 = vrot.slane %v179, 4
    %v187 = vmax.f32 %v179, %v186
    %v188 = vrot.slane %v187, 2
    %v189 = vmax.f32 %v187, %v188
    %v190 = vrot.slane %v189, 1
    %v191 = vmax.f32 %v189, %v190
    %v192 = vsub.f32 %v176, %v185
    %v193 = vsub.f32 %v179, %v191
    %v194 = vmul.f32 %v192, 1.442695
    %v195 = vpow.pop %v194
    %v196 = vmul.f32 %v193, 1.442695
    %v197 = vpow.pop %v196
    %v198 = vrot.slane %v195, 4
    %v199 = vadd.f32 %v195, %v198
    %v200 = vrot.slane %v199, 2
    %v201 = vadd.f32 %v199, %v200
    %v202 = vrot.slane %v201, 1
    %v203 = vadd.f32 %v201, %v202
    %v204 = vrot.slane %v197, 4
    %v205 = vadd.f32 %v197, %v204
    %v206 = vrot.slane %v205, 2
    %v207 = vadd.f32 %v205, %v206
    %v208 = vrot.slane %v207, 1
    %v209 = vadd.f32 %v207, %v208
    %v210 = vrcp.pop %v203
    %v211 = vmul.f32 %v195, %v210
    %v212 = vrcp.pop %v209
    %v213 = vmul.f32 %v197, %v212
    %v214 = vmul.f32 %v211, %v59
    %v215 = vmul.f32 %v213, %v60
    %v216 = vsel %vm65, %v214, 0.0
    %v217 = vrot.slane %v216, 4
    %v218 = vadd.f32 %v216, %v217
    %v219 = vrot.slane %v218, 2
    %v220 = vadd.f32 %v218, %v219
    %v221 = vrot.slane %v220, 1
    %v222 = vadd.f32 %v220, %v221
    %v223 = vsel %vm65, %v215, 0.0
    %v224 = vrot.slane %v223, 4
    %v225 = vadd.f32 %v223, %v224
    %v226 = vrot.slane %v225, 2
    %v227 = vadd.f32 %v225, %v226
    %v228 = vrot.slane %v227, 1
    %v229 = vadd.f32 %v227, %v228
    %vm232 = vcmask 1041409
    %v233 = vsel %vm232, %v229, %v222
    %vm235 = vcmask 254976
    %236 = vst.msk [vmem:[#allocation8] sm:$0x3] %vm235, %v233
    // Predicated region
    $region30: #{tpu_custom_call.1} parent=1 // pred_check
      _
    $region31: #{tpu_custom_call.1} parent=1 // pred_check_branch
      %238 = sbr.rel (0) target = $region33
    $region32: #{tpu_custom_call.1} parent=1 // pred_region
      %s240 = ssub.s32 32, 32
      %241 = vsyncadd [#allocation4], %s240
      %s243 = sshll.u32 [#allocation8], 4
      %s244 = int_to_ptr.vmem [resolvable:$true] %s243
      %246 = dma.vmem_to_hbm [thread:$0]  %s244, 32, %s4, [#allocation4]
    $region33: #{tpu_custom_call.1} parent=1 // pred_fallthru
      _
    // Predicated region
    $region34: #{tpu_custom_call.1} parent=1 // pred_check
      _
    $region35: #{tpu_custom_call.1} parent=1 // pred_check_branch
      %248 = sbr.rel (0) target = $region37
    $region36: #{tpu_custom_call.1} parent=1 // pred_region
      %249 = dma.done [#allocation4], 32
    $region37: #{tpu_custom_call.1} parent=1 // pred_fallthru
      _
    %250 = vsyncpa [#allocation3], 1
    %251 = vsyncpa [#allocation6], 1
    %252 = vsyncpa [#allocation4], 1

</llo_original>
